<compile_context>
chip_gen: v6e
topology: v6e:2x2x1
jax: 0.10.0
libtpu: 0.0.40
codegen_flags: <defaults>
</compile_context>

<pallas_src>
import functools

import jax
import jax.numpy as jnp
from jax.experimental import pallas as pl
from jax.experimental.pallas import tpu as pltpu


def _round_up(x: int, m: int) -> int:
    return ((x + m - 1) // m) * m


def _output_ber_kernel(x_ref, w_ref, b_ref, sf_ref, ff_ref, res_ref, px_ref):
    # x_ref: [TB, K], w_ref: [K, TD] (pre-transposed -> natural, lane-dense MXU RHS).
    z = jnp.dot(x_ref[...], w_ref[...], preferred_element_type=jnp.float32)
    z = z + b_ref[...]                       # [TB, TD] + [1, TD]
    px = jax.nn.sigmoid(z)                   # Bernoulli probabilities
    px_ref[...] = px.astype(px_ref.dtype)
    # Broadcast multiply by per-sample [TB,1] and per-feature [1,TD] factors.
    res_ref[...] = (px * sf_ref[...] * ff_ref[...]).astype(res_ref.dtype)


def output_module_ber(latent_rep, output_batch, lib, weight, bias, feature_scalar,
                      latent_lib=None, *, tb_cap=256, td_cap=2048,
                      out_dtype=jnp.float32,
                      vmem_limit_bytes=64 * 1024 * 1024):
    """Forward pass of Output_Module_Ber (sample_factor=True, feature_factor=True).

    latent_rep:     [B, H]
    output_batch:   [B, Bn] or None
    lib:            [B, 1]
    weight:         [D, H+Bn]   (PyTorch Linear layout: [out, in])
    bias:           [D]
    feature_scalar: [D]
    latent_lib:     unused in the sample_factor=True path (kept for signature parity)
    out_dtype:      dtype of the two [B, D] outputs (bf16 halves HBM write bytes; the
                    kernel is write-bound, so that is the biggest lever if tolerated)
    """
    del latent_lib  # sample_factor=True path ignores latent_lib
    if output_batch is not None:
        x = jnp.concatenate([latent_rep, output_batch], axis=1)
    else:
        x = latent_rep
    x = x.astype(jnp.float32)
    B, K = x.shape
    D = weight.shape[0]

    # Tiny factors: cheaper to compute once here than to (re)write them per grid tile.
    sf = jax.nn.sigmoid(lib.reshape(B, 1).astype(jnp.float32))               # [B, 1]
    ff = jax.nn.sigmoid(feature_scalar.reshape(1, D).astype(jnp.float32))    # [1, D]
    b2 = bias.reshape(1, D).astype(jnp.float32)                              # [1, D]
    # One-time transpose to [K, D]: lane-dense weight tiles, natural MXU RHS layout.
    w = weight.astype(jnp.float32).T                                         # [K, D]

    # Tile sizes: lane-dense (TD multiple of 128), TB multiple of 8; caps sized so
    # double-buffered outputs stay well inside v7x's 64 MiB VMEM.
    TB = min(_round_up(B, 8), tb_cap)
    TD = min(_round_up(D, 128), td_cap)
    nb = pl.cdiv(B, TB)
    nd = pl.cdiv(D, TD)
    grid = (nd, nb)  # D-tiles outer, B-tiles inner -> weight tile resident across inner axis

    # Weight tile only changes with the outer axis; for large-K configs single-buffer
    # it to free VMEM (stalls only at the few j transitions).
    w_spec_kwargs = {}
    if K * TD * 4 >= (4 << 20):
        w_spec_kwargs["pipeline_mode"] = pl.Buffered(1)

    in_specs = [
        pl.BlockSpec((TB, K), lambda j, i: (i, 0)),   # x          (changes with i only)
        pl.BlockSpec((K, TD), lambda j, i: (0, j),    # weight     (changes with j only)
                     **w_spec_kwargs),
        pl.BlockSpec((1, TD), lambda j, i: (0, j)),   # bias
        pl.BlockSpec((TB, 1), lambda j, i: (i, 0)),   # sample factor
        pl.BlockSpec((1, TD), lambda j, i: (0, j)),   # feature factor
    ]
    out_specs = [
        pl.BlockSpec((TB, TD), lambda j, i: (i, j)),  # result
        pl.BlockSpec((TB, TD), lambda j, i: (i, j)),  # px
    ]
    out_shapes = (
        jax.ShapeDtypeStruct((B, D), out_dtype),      # output_result
        jax.ShapeDtypeStruct((B, D), out_dtype),      # output_px
    )

    out_bytes = jnp.dtype(out_dtype).itemsize
    cost = pl.CostEstimate(
        flops=2 * B * D * K,
        transcendentals=B * D,
        bytes_accessed=4 * (B * K * nd + D * K + D + B + D) + 2 * B * D * out_bytes,
    )

    res, px = pl.pallas_call(
        _output_ber_kernel,
        out_shape=out_shapes,
        grid=grid,
        in_specs=in_specs,
        out_specs=out_specs,
        compiler_params=pltpu.CompilerParams(
            dimension_semantics=("parallel", "parallel"),
            vmem_limit_bytes=vmem_limit_bytes),
        cost_estimate=cost,
    )(x, w, b2, sf, ff)

    return res, px, sf, ff.reshape(D)


if __name__ == "__main__":
    # Small shapes consistent with the module's forward, chosen so the grid has
    # multiple tiles in both axes (exercises the tiling path).
    B = 16                # batch
    hidden = 32           # hidden_layer[-1]
    batch_num = 4         # output_batch_num (one-hot batch covariate)
    output_dim = 384      # output_dim (#genes)

    key = jax.random.PRNGKey(0)
    k1, k2, k3, k4, k5 = jax.random.split(key, 5)

    latent_rep = jax.random.normal(k1, (B, hidden), dtype=jnp.float32)
    output_batch = jax.nn.one_hot(
        jax.random.randint(k2, (B,), 0, batch_num), batch_num, dtype=jnp.float32)
    lib = jax.random.normal(k3, (B, 1), dtype=jnp.float32)

    in_features = hidden + batch_num
    bound = 1.0 / jnp.sqrt(in_features)
    weight = jax.random.uniform(k4, (output_dim, in_features),
                                minval=-bound, maxval=bound, dtype=jnp.float32)
    bias = jax.random.uniform(k5, (output_dim,),
                              minval=-bound, maxval=bound, dtype=jnp.float32)
    feature_scalar = jnp.zeros((output_dim,), dtype=jnp.float32)

    # Force small tiles so grid = (3, 2) and tiling / pipelining is actually exercised.
    fwd = jax.jit(functools.partial(output_module_ber, tb_cap=8, td_cap=128))
    res, px, sf, ff = fwd(latent_rep, output_batch, lib, weight, bias, feature_scalar)
    jax.block_until_ready((res, px, sf, ff))

    # Pure-JAX reference check (silent on success).
    x_ref = jnp.concatenate([latent_rep, output_batch], axis=1)
    px_ref = jax.nn.sigmoid(x_ref @ weight.T + bias)
    sf_ref = jax.nn.sigmoid(lib)
    ff_ref = jax.nn.sigmoid(feature_scalar)
    res_ref = px_ref * sf_ref * ff_ref
    assert jnp.allclose(px, px_ref, atol=1e-5)
    assert jnp.allclose(sf, sf_ref, atol=1e-6)
    assert jnp.allclose(ff, ff_ref, atol=1e-6)
    assert jnp.allclose(res, res_ref, atol=1e-5)
    assert res.shape == (B, output_dim) and px.shape == (B, output_dim)
    assert sf.shape == (B, 1) and ff.shape == (output_dim,)

    print("KERNEL_OK")
</pallas_src>

<mosaic_0001>
module attributes {stable_mosaic.version = 11 : i64} {
  func.func @_output_ber_kernel(%arg0: i32, %arg1: i32, %arg2: memref<8x36xf32, #tpu.memory_space<vmem>>, %arg3: memref<36x128xf32, #tpu.memory_space<vmem>>, %arg4: memref<1x128xf32, #tpu.memory_space<vmem>>, %arg5: memref<8x1xf32, #tpu.memory_space<vmem>>, %arg6: memref<1x128xf32, #tpu.memory_space<vmem>>, %arg7: memref<8x128xf32, #tpu.memory_space<vmem>>, %arg8: memref<8x128xf32, #tpu.memory_space<vmem>>) attributes {dimension_semantics = [#tpu.dimension_semantics<parallel>, #tpu.dimension_semantics<parallel>], iteration_bounds = array<i64: 3, 2>, scalar_prefetch = 0 : i64, scratch_operands = 0 : i64, tpu.core_type = #tpu.core_type<tc>, window_params = [{transform_indices = @transform_0, window_bounds = array<i64: 8, 36>}, {transform_indices = @transform_1, window_bounds = array<i64: 36, 128>}, {transform_indices = @transform_2, window_bounds = array<i64: 1, 128>}, {transform_indices = @transform_3, window_bounds = array<i64: 8, 1>}, {transform_indices = @transform_4, window_bounds = array<i64: 1, 128>}, {transform_indices = @transform_5, window_bounds = array<i64: 8, 128>}, {transform_indices = @transform_6, window_bounds = array<i64: 8, 128>}]} {
    %c0 = arith.constant 0 : index
    %c0_0 = arith.constant 0 : index
    %0 = vector.load %arg2[%c0, %c0_0] : memref<8x36xf32, #tpu.memory_space<vmem>>, vector<8x36xf32>
    %c0_1 = arith.constant 0 : index
    %c0_2 = arith.constant 0 : index
    %1 = vector.load %arg3[%c0_1, %c0_2] : memref<36x128xf32, #tpu.memory_space<vmem>>, vector<36x128xf32>
    %cst = arith.constant dense<0.000000e+00> : vector<8x128xf32>
    %2 = tpu.matmul %0, %1, %cst {dimension_numbers = #tpu.dot_dimension_numbers<[1], [0], [0], [1], [0, 0, 1, 1], [], []>} : vector<8x36xf32>, vector<36x128xf32>, vector<8x128xf32> -> vector<8x128xf32>
    %c0_3 = arith.constant 0 : index
    %c0_4 = arith.constant 0 : index
    %3 = vector.load %arg4[%c0_3, %c0_4] : memref<1x128xf32, #tpu.memory_space<vmem>>, vector<1x128xf32>
    %4 = vector.broadcast %3 : vector<1x128xf32> to vector<8x128xf32>
    %5 = arith.addf %2, %4 : vector<8x128xf32>
    %6 = arith.negf %5 : vector<8x128xf32>
    %7 = math.exp %6 : vector<8x128xf32>
    %cst_5 = arith.constant 1.000000e+00 : f32
    %8 = vector.broadcast %cst_5 : f32 to vector<8x128xf32>
    %9 = arith.addf %8, %7 : vector<8x128xf32>
    %10 = arith.divf %8, %9 : vector<8x128xf32>
    %c0_6 = arith.constant 0 : index
    %c0_7 = arith.constant 0 : index
    %11 = vector.load %arg8[%c0_6, %c0_7] : memref<8x128xf32, #tpu.memory_space<vmem>>, vector<8x128xf32>
    tpu.vector_store %arg8[%c0_6, %c0_7], %10 {strides = array<i32>} : memref<8x128xf32, #tpu.memory_space<vmem>>, vector<8x128xf32>,
    %c0_8 = arith.constant 0 : index
    %c0_9 = arith.constant 0 : index
    %12 = vector.load %arg5[%c0_8, %c0_9] : memref<8x1xf32, #tpu.memory_space<vmem>>, vector<8x1xf32>
    %13 = vector.broadcast %12 : vector<8x1xf32> to vector<8x128xf32>
    %14 = arith.mulf %10, %13 : vector<8x128xf32>
    %c0_10 = arith.constant 0 : index
    %c0_11 = arith.constant 0 : index
    %15 = vector.load %arg6[%c0_10, %c0_11] : memref<1x128xf32, #tpu.memory_space<vmem>>, vector<1x128xf32>
    %16 = vector.broadcast %15 : vector<1x128xf32> to vector<8x128xf32>
    %17 = arith.mulf %14, %16 : vector<8x128xf32>
    %c0_12 = arith.constant 0 : index
    %c0_13 = arith.constant 0 : index
    %18 = vector.load %arg7[%c0_12, %c0_13] : memref<8x128xf32, #tpu.memory_space<vmem>>, vector<8x128xf32>
    tpu.vector_store %arg7[%c0_12, %c0_13], %17 {strides = array<i32>} : memref<8x128xf32, #tpu.memory_space<vmem>>, vector<8x128xf32>,
    return
  }
  func.func @transform_0(%arg0: i32, %arg1: i32) -> (i32, i32) {
    %c0_i32 = arith.constant 0 : i32
    %c0_i32_0 = arith.constant 0 : i32
    return %arg1, %c0_i32 : i32, i32
  }
  func.func @transform_1(%arg0: i32, %arg1: i32) -> (i32, i32) {
    %c0_i32 = arith.constant 0 : i32
    %c0_i32_0 = arith.constant 0 : i32
    return %c0_i32, %arg0 : i32, i32
  }
  func.func @transform_2(%arg0: i32, %arg1: i32) -> (i32, i32) {
    %c0_i32 = arith.constant 0 : i32
    %c0_i32_0 = arith.constant 0 : i32
    return %c0_i32, %arg0 : i32, i32
  }
  func.func @transform_3(%arg0: i32, %arg1: i32) -> (i32, i32) {
    %c0_i32 = arith.constant 0 : i32
    %c0_i32_0 = arith.constant 0 : i32
    return %arg1, %c0_i32 : i32, i32
  }
  func.func @transform_4(%arg0: i32, %arg1: i32) -> (i32, i32) {
    %c0_i32 = arith.constant 0 : i32
    %c0_i32_0 = arith.constant 0 : i32
    return %c0_i32, %arg0 : i32, i32
  }
  func.func @transform_5(%arg0: i32, %arg1: i32) -> (i32, i32) {
    %c0_i32 = arith.constant 0 : i32
    return %arg1, %arg0 : i32, i32
  }
  func.func @transform_6(%arg0: i32, %arg1: i32) -> (i32, i32) {
    %c0_i32 = arith.constant 0 : i32
    return %arg1, %arg0 : i32, i32
  }
}

</mosaic_0001>

<llo_original>
// kernel: output_module_ber.1
$region0: #{output_module_ber.1}
  #allocation0 [shape = 'u32[]', space=smem, size = 0x4, offset = 0x4, fixed_abs, tag = 'smem constant byte address 0x4 - core index']
  #allocation1 [shape = 'u32[144,128]{1,0:T(1,128)}', space=vmem, size = 0x12000, scoped, tag = 'internal scratch']
  %s0 = inlined_call_operand.vmem [shape: f32[16,36], index: 0, kind: input, shape index: {}]
  %s1 = inlined_call_operand.vmem [shape: f32[36,384], index: 1, kind: input, shape index: {}]
  %s2 = inlined_call_operand.vmem [shape: f32[1,384], index: 2, kind: input, shape index: {}]
  %s3 = inlined_call_operand.vmem [shape: f32[16,1], index: 3, kind: input, shape index: {}]
  %s4 = inlined_call_operand.vmem [shape: f32[1,384], index: 4, kind: input, shape index: {}]
  %s5 = inlined_call_operand.hbm [shape: f32[16,384], index: 5, kind: output, shape index: {0}]
  %s6 = inlined_call_operand.hbm [shape: f32[16,384], index: 6, kind: output, shape index: {1}]
  %7 = xla_tuple %s5, %s6
  %s8 = sld [smem:[#allocation0]]
  $region99: #{output_module_ber.1} parent=0
    _
  %s10 = ssub.s32 1, %s8
  %s11 = scalar_select 0, %s10, %s8
  $region1: #{output_module_ber.1} parent=0
    #allocation2 [shape = 'u8[40960]{0}', space=vmem, size = 0xa000, scoped, tag = 'input window, operand 1']
    #allocation3 [shape = 'u8[8192]{0}', space=vmem, size = 0x2000, scoped, tag = 'output window, operand 0']
    #allocation4 [shape = 's32[2]{0}', space=sflag, size = 0x8, scoped, tag = 'scoped memory for output_module_ber.1']
    #allocation5 [shape = 'u8[8192]{0}', space=vmem, size = 0x2000, scoped, tag = 'output window, operand 1']
    #allocation6 [shape = 's32[2]{0}', space=sflag, size = 0x8, scoped, tag = 'scoped memory for output_module_ber.1']
    %12 = vsyncpa [#allocation4], 0
    %s13 = scalar_lea.sflag [#allocation4], 1
    %14 = vsyncpa %s13, 0
    %15 = vsyncpa [#allocation6], 0
    %s16 = scalar_lea.sflag [#allocation6], 1
    %17 = vsyncpa %s16, 0
    loop: start=0, step=1, limit=8
    $region2: #{output_module_ber.1} parent=1 // loop_pre_header
      _
    $region3: #{output_module_ber.1} parent=1 // loop_header
      %s19 = sphi 0, %s23
      %p20 = scmp.ge.s32.totalorder %s19, 8
      %s26 = sphi 0, %s38
      %s27 = sphi 0, %s34
      %s28 = sphi 0, %s26
      %s29 = sphi 0, %s27
      %s30 = sphi 0, %s28
      %s31 = sphi 0, %s29
      %s41 = sphi 0, %s43
      %s44 = sphi 0, %s41
      %s45 = sphi 0, %s44
      %s61 = sphi 0, %s45
      %s67 = sphi 0, %s69
      %s70 = sphi 0, %s67
      %s71 = sphi 0, %s70
      %s87 = sphi 0, %s71
      %s93 = sphi 0, %s95
      %s96 = sphi 0, %s93
      %s97 = sphi 0, %s96
      %s113 = sphi 0, %s97
      %s119 = sphi 0, %s121
      %s122 = sphi 0, %s119
      %s123 = sphi 0, %s122
      %s139 = sphi 0, %s123
      %s145 = sphi 0, %s147
      %s148 = sphi 0, %s145
      %s149 = sphi 0, %s148
      %s165 = sphi 0, %s149
      %s173 = sphi 0, %s175
      %s176 = sphi 0, %s173
      %s177 = sphi 0, %s176
      %s193 = sphi 0, %s177
      %s201 = sphi 0, %s203
      %s204 = sphi 0, %s201
      %s205 = sphi 0, %s204
      %s221 = sphi 0, %s205
    $region4: #{output_module_ber.1} parent=1 // loop_header_branch
      %22 = sbr.rel (%p20) target = $region8
    $region5: #{output_module_ber.1} parent=1 // loop_body
      %s24 = ssub.s32 %s19, 1
      %s25 = ssub.s32 %s19, 2
      %s32 = sadd.s32 1, %s27
      %p33 = scmp.ge.s32.totalorder %s32, 2
      %s34 = scalar_select %p33, 0, %s32
      %s35 = sadd.s32 1, %s26
      %s36 = scalar_select %p33, %s35, %s26
      %p37 = scmp.ge.s32.totalorder %s36, 3
      %s38 = scalar_select %p37, 0, %s36
      %s39 = ssub.s32 %s27, %s34
      %p40 = scmp.eq.s32.totalorder %s39, 0
      %s42 = sadd.s32 %s41, 1
      %s43 = scalar_select %p40, %s41, %s42
      %p46 = pneg %p40
      %p47 = scmp.eq.s32.totalorder %s19, 5
      %p48 = por %p46, %p47
      %p49 = scmp.ne.s32.totalorder %s41, %s44
      %p50 = scmp.eq.s32.totalorder %s19, 0
      %p51 = por %p49, %p50
      %p52 = scmp.ne.s32.totalorder %s41, %s44
      %p53 = scmp.eq.s32.totalorder %s24, 5
      %p54 = por %p52, %p53
      %p55 = scmp.ne.s32.totalorder %s44, %s45
      %p56 = scmp.eq.s32.totalorder %s24, 0
      %p57 = por %p55, %p56
      %p58 = scmp.ne.s32.totalorder %s44, %s45
      %p59 = scmp.eq.s32.totalorder %s25, 5
      %p60 = por %p58, %p59
      %p62 = scmp.ne.s32.totalorder %s45, %s61
      %p63 = scmp.eq.s32.totalorder %s25, 0
      %p64 = por %p62, %p63
      %s65 = ssub.s32 %s26, %s38
      %p66 = scmp.eq.s32.totalorder %s65, 0
      %s68 = sadd.s32 %s67, 1
      %s69 = scalar_select %p66, %s67, %s68
      %p72 = pneg %p66
      %p73 = scmp.eq.s32.totalorder %s19, 5
      %p74 = por %p72, %p73
      %p75 = scmp.ne.s32.totalorder %s67, %s70
      %p76 = scmp.eq.s32.totalorder %s19, 0
      %p77 = por %p75, %p76
      %p78 = scmp.ne.s32.totalorder %s67, %s70
      %p79 = scmp.eq.s32.totalorder %s24, 5
      %p80 = por %p78, %p79
      %p81 = scmp.ne.s32.totalorder %s70, %s71
      %p82 = scmp.eq.s32.totalorder %s24, 0
      %p83 = por %p81, %p82
      %p84 = scmp.ne.s32.totalorder %s70, %s71
      %p85 = scmp.eq.s32.totalorder %s25, 5
      %p86 = por %p84, %p85
      %p88 = scmp.ne.s32.totalorder %s71, %s87
      %p89 = scmp.eq.s32.totalorder %s25, 0
      %p90 = por %p88, %p89
      %s91 = ssub.s32 %s26, %s38
      %p92 = scmp.eq.s32.totalorder %s91, 0
      %s94 = sadd.s32 %s93, 1
      %s95 = scalar_select %p92, %s93, %s94
      %p98 = pneg %p92
      %p99 = scmp.eq.s32.totalorder %s19, 5
      %p100 = por %p98, %p99
      %p101 = scmp.ne.s32.totalorder %s93, %s96
      %p102 = scmp.eq.s32.totalorder %s19, 0
      %p103 = por %p101, %p102
      %p104 = scmp.ne.s32.totalorder %s93, %s96
      %p105 = scmp.eq.s32.totalorder %s24, 5
      %p106 = por %p104, %p105
      %p107 = scmp.ne.s32.totalorder %s96, %s97
      %p108 = scmp.eq.s32.totalorder %s24, 0
      %p109 = por %p107, %p108
      %p110 = scmp.ne.s32.totalorder %s96, %s97
      %p111 = scmp.eq.s32.totalorder %s25, 5
      %p112 = por %p110, %p111
      %p114 = scmp.ne.s32.totalorder %s97, %s113
      %p115 = scmp.eq.s32.totalorder %s25, 0
      %p116 = por %p114, %p115
      %s117 = ssub.s32 %s27, %s34
      %p118 = scmp.eq.s32.totalorder %s117, 0
      %s120 = sadd.s32 %s119, 1
      %s121 = scalar_select %p118, %s119, %s120
      %p124 = pneg %p118
      %p125 = scmp.eq.s32.totalorder %s19, 5
      %p126 = por %p124, %p125
      %p127 = scmp.ne.s32.totalorder %s119, %s122
      %p128 = scmp.eq.s32.totalorder %s19, 0
      %p129 = por %p127, %p128
      %p130 = scmp.ne.s32.totalorder %s119, %s122
      %p131 = scmp.eq.s32.totalorder %s24, 5
      %p132 = por %p130, %p131
      %p133 = scmp.ne.s32.totalorder %s122, %s123
      %p134 = scmp.eq.s32.totalorder %s24, 0
      %p135 = por %p133, %p134
      %p136 = scmp.ne.s32.totalorder %s122, %s123
      %p137 = scmp.eq.s32.totalorder %s25, 5
      %p138 = por %p136, %p137
      %p140 = scmp.ne.s32.totalorder %s123, %s139
      %p141 = scmp.eq.s32.totalorder %s25, 0
      %p142 = por %p140, %p141
      %s143 = ssub.s32 %s26, %s38
      %p144 = scmp.eq.s32.totalorder %s143, 0
      %s146 = sadd.s32 %s145, 1
      %s147 = scalar_select %p144, %s145, %s146
      %p150 = pneg %p144
      %p151 = scmp.eq.s32.totalorder %s19, 5
      %p152 = por %p150, %p151
      %p153 = scmp.ne.s32.totalorder %s145, %s148
      %p154 = scmp.eq.s32.totalorder %s19, 0
      %p155 = por %p153, %p154
      %p156 = scmp.ne.s32.totalorder %s145, %s148
      %p157 = scmp.eq.s32.totalorder %s24, 5
      %p158 = por %p156, %p157
      %p159 = scmp.ne.s32.totalorder %s148, %s149
      %p160 = scmp.eq.s32.totalorder %s24, 0
      %p161 = por %p159, %p160
      %p162 = scmp.ne.s32.totalorder %s148, %s149
      %p163 = scmp.eq.s32.totalorder %s25, 5
      %p164 = por %p162, %p163
      %p166 = scmp.ne.s32.totalorder %s149, %s165
      %p167 = scmp.eq.s32.totalorder %s25, 0
      %p168 = por %p166, %p167
      %s169 = ssub.s32 %s27, %s34
      %s170 = ssub.s32 %s26, %s38
      %s171 = sor.u32 %s169, %s170
      %p172 = scmp.eq.s32.totalorder %s171, 0
      %s174 = sadd.s32 %s173, 1
      %s175 = scalar_select %p172, %s173, %s174
      %p178 = pneg %p172
      %p179 = scmp.eq.s32.totalorder %s19, 5
      %p180 = por %p178, %p179
      %p181 = scmp.ne.s32.totalorder %s173, %s176
      %p182 = scmp.eq.s32.totalorder %s19, 0
      %p183 = por %p181, %p182
      %p184 = scmp.ne.s32.totalorder %s173, %s176
      %p185 = scmp.eq.s32.totalorder %s24, 5
      %p186 = por %p184, %p185
      %p187 = scmp.ne.s32.totalorder %s176, %s177
      %p188 = scmp.eq.s32.totalorder %s24, 0
      %p189 = por %p187, %p188
      %p190 = scmp.ne.s32.totalorder %s176, %s177
      %p191 = scmp.eq.s32.totalorder %s25, 5
      %p192 = por %p190, %p191
      %p194 = scmp.ne.s32.totalorder %s177, %s193
      %p195 = scmp.eq.s32.totalorder %s25, 0
      %p196 = por %p194, %p195
      %s197 = ssub.s32 %s27, %s34
      %s198 = ssub.s32 %s26, %s38
      %s199 = sor.u32 %s197, %s198
      %p200 = scmp.eq.s32.totalorder %s199, 0
      %s202 = sadd.s32 %s201, 1
      %s203 = scalar_select %p200, %s201, %s202
      %p206 = pneg %p200
      %p207 = scmp.eq.s32.totalorder %s19, 5
      %p208 = por %p206, %p207
      %p209 = scmp.ne.s32.totalorder %s201, %s204
      %p210 = scmp.eq.s32.totalorder %s19, 0
      %p211 = por %p209, %p210
      %p212 = scmp.ne.s32.totalorder %s201, %s204
      %p213 = scmp.eq.s32.totalorder %s24, 5
      %p214 = por %p212, %p213
      %p215 = scmp.ne.s32.totalorder %s204, %s205
      %p216 = scmp.eq.s32.totalorder %s24, 0
      %p217 = por %p215, %p216
      %p218 = scmp.ne.s32.totalorder %s204, %s205
      %p219 = scmp.eq.s32.totalorder %s25, 5
      %p220 = por %p218, %p219
      %p222 = scmp.ne.s32.totalorder %s205, %s221
      %p223 = scmp.eq.s32.totalorder %s25, 0
      %p224 = por %p222, %p223
      %p225 = scmp.le.s32.totalorder 1, %s19
      %p226 = scmp.lt.s32.totalorder %s19, 7
      %p227 = pnand %p225, %p226
      %p228 = pneg %p227
      // Predicated region
      $region9: #{output_module_ber.1} parent=5 // pred_check
        _
      $region10: #{output_module_ber.1} parent=5 // pred_check_branch
        %230 = sbr.rel (%p227) target = $region12
      $region11: #{output_module_ber.1} parent=5 // pred_region
        %s231 = ssub.s32 %s19, 1
      $region12: #{output_module_ber.1} parent=5 // pred_fallthru
        _
      %p232 = scmp.lt.s32.totalorder %s19, 6
      // Predicated region
      $region13: #{output_module_ber.1} parent=5 // pred_check
        %p233 = pneg %p232
      $region14: #{output_module_ber.1} parent=5 // pred_check_branch
        %235 = sbr.rel (%p233) target = $region16
      $region15: #{output_module_ber.1} parent=5 // pred_region
        // Predicated region
        $region17: #{output_module_ber.1} parent=15 // pred_check
          %p236 = pneg %p51
        $region18: #{output_module_ber.1} parent=15 // pred_check_branch
          %238 = sbr.rel (%p236) target = $region20
        $region19: #{output_module_ber.1} parent=15 // pred_region
          %p239 = scmp.lt.s32.totalorder %s27, 1
          %s240 = scalar_select %p239, %s27, 1
          %s241 = smul.addr %s240, 8
          %s242 = scalar_lea.vmem %s0, %s241
        $region20: #{output_module_ber.1} parent=15 // pred_fallthru
          _
        // Predicated region
        $region21: #{output_module_ber.1} parent=15 // pred_check
          %p243 = pneg %p77
        $region22: #{output_module_ber.1} parent=15 // pred_check_branch
          %245 = sbr.rel (%p243) target = $region24
        $region23: #{output_module_ber.1} parent=15 // pred_region
          %s246 = sand.u32 %s67, 1
          %s247 = sand.u32 %s67, 1
          %s248 = smul.addr %s247, 40
          %s249 = scalar_lea.vmem [#allocation2], %s248
          %s250 = smul.addr %s26, 8
          %s251 = scalar_lea.vmem %s1, %s250
          // Predicated region
          $region25: #{output_module_ber.1} parent=23 // pred_check
            _
          $region26: #{output_module_ber.1} parent=23 // pred_check_branch
            %253 = sbr.rel (0) target = $region28
          $region27: #{output_module_ber.1} parent=23 // pred_region
            // Predicated region
            $region29: #{output_module_ber.1} parent=27 // pred_check
              _
            $region30: #{output_module_ber.1} parent=27 // pred_check_branch
              %255 = sbr.rel (0) target = $region32
            $region31: #{output_module_ber.1} parent=27 // pred_region
              // Predicated region
              $region44: #{output_module_ber.1} parent=31 // pred_check
                _
              $region45: #{output_module_ber.1} parent=31 // pred_check_branch
                %279 = sbr.rel (0) target = $region47
              $region46: #{output_module_ber.1} parent=31 // pred_region
                loop: start=0, step=1, limit=1
                $region48: #{output_module_ber.1} parent=46 // loop_pre_header
                  _
                $region49: #{output_module_ber.1} parent=46 // loop_header
                  %s281 = sphi 0, %s285
                  %p282 = scmp.ge.s32.totalorder %s281, 1
                  %s286 = sphi %s251, %s251
                  %s287 = sphi %s249, %s249
                $region50: #{output_module_ber.1} parent=46 // loop_header_branch
                  %284 = sbr.rel (%p282) target = $region54
                $region51: #{output_module_ber.1} parent=46 // loop_body
                  %v288 = vld [vmem:[%s286] sm:$0xff]
                  %289 = vst [vmem:[%s287] sm:$0xff] %v288
                  %v290 = vld [vmem:[%s286 + $0x18] sm:$0xff]
                  %291 = vst [vmem:[%s287 + $0x8] sm:$0xff] %v290
                  %v292 = vld [vmem:[%s286 + $0x30] sm:$0xff]
                  %293 = vst [vmem:[%s287 + $0x10] sm:$0xff] %v292
                  %v294 = vld [vmem:[%s286 + $0x48] sm:$0xff]
                  %295 = vst [vmem:[%s287 + $0x18] sm:$0xff] %v294
                  %v296 = vld [vmem:[%s286 + $0x60] sm:$0xff]
                  %297 = vst [vmem:[%s287 + $0x20] sm:$0xff] %v296
                $region52: #{output_module_ber.1} parent=46 // loop_footer
                  %s285 = sadd.s32 1, %s281
                $region53: #{output_module_ber.1} parent=46 // loop_footer_branch
                  %280 = sbr.rel target = $region49
                $region54: #{output_module_ber.1} parent=46 // loop_exit
                  _
              $region47: #{output_module_ber.1} parent=31 // pred_fallthru
                _
              // Predicated region
              $region55: #{output_module_ber.1} parent=31 // pred_check
                _
              $region56: #{output_module_ber.1} parent=31 // pred_check_branch
                %299 = sbr.rel target = $region58
              $region57: #{output_module_ber.1} parent=31 // pred_region
                _
              $region58: #{output_module_ber.1} parent=31 // pred_fallthru
                _
            $region32: #{output_module_ber.1} parent=27 // pred_fallthru
              _
            // Predicated region
            $region33: #{output_module_ber.1} parent=27 // pred_check
              _
            $region34: #{output_module_ber.1} parent=27 // pred_check_branch
              %257 = sbr.rel target = $region36
            $region35: #{output_module_ber.1} parent=27 // pred_region
              %s259 = ssub.s32 256, 1
              loop: start=0, step=1, limit=1
              $region37: #{output_module_ber.1} parent=35 // loop_pre_header
                _
              $region38: #{output_module_ber.1} parent=35 // loop_header
                %s261 = sphi 0, %s265
                %p262 = scmp.ge.s32.totalorder %s261, 1
                %s266 = sphi %s251, %s251
                %s267 = sphi %s249, %s249
              $region39: #{output_module_ber.1} parent=35 // loop_header_branch
                %264 = sbr.rel (%p262) target = $region43
              $region40: #{output_module_ber.1} parent=35 // loop_body
                %v268 = vld [vmem:[%s266] sm:%s259]
                %269 = vst [vmem:[%s267] sm:%s259] %v268
                %v270 = vld [vmem:[%s266 + $0x18] sm:%s259]
                %271 = vst [vmem:[%s267 + $0x8] sm:%s259] %v270
                %v272 = vld [vmem:[%s266 + $0x30] sm:%s259]
                %273 = vst [vmem:[%s267 + $0x10] sm:%s259] %v272
                %v274 = vld [vmem:[%s266 + $0x48] sm:%s259]
                %275 = vst [vmem:[%s267 + $0x18] sm:%s259] %v274
                %v276 = vld [vmem:[%s266 + $0x60] sm:%s259]
                %277 = vst [vmem:[%s267 + $0x20] sm:%s259] %v276
              $region41: #{output_module_ber.1} parent=35 // loop_footer
                %s265 = sadd.s32 1, %s261
              $region42: #{output_module_ber.1} parent=35 // loop_footer_branch
                %260 = sbr.rel target = $region38
              $region43: #{output_module_ber.1} parent=35 // loop_exit
                _
            $region36: #{output_module_ber.1} parent=27 // pred_fallthru
              _
          $region28: #{output_module_ber.1} parent=23 // pred_fallthru
            _
          %300 = vnop
        $region24: #{output_module_ber.1} parent=15 // pred_fallthru
          _
        // Predicated region
        $region59: #{output_module_ber.1} parent=15 // pred_check
          %p301 = pneg %p103
        $region60: #{output_module_ber.1} parent=15 // pred_check_branch
          %303 = sbr.rel (%p301) target = $region62
        $region61: #{output_module_ber.1} parent=15 // pred_region
          %p304 = scmp.lt.s32.totalorder %s26, 2
          %s305 = scalar_select %p304, %s26, 2
          %s306 = scalar_lea.vmem %s2, %s305
        $region62: #{output_module_ber.1} parent=15 // pred_fallthru
          _
        // Predicated region
        $region63: #{output_module_ber.1} parent=15 // pred_check
          %p307 = pneg %p129
        $region64: #{output_module_ber.1} parent=15 // pred_check_branch
          %309 = sbr.rel (%p307) target = $region66
        $region65: #{output_module_ber.1} parent=15 // pred_region
          %p310 = scmp.lt.s32.totalorder %s27, 1
          %s311 = scalar_select %p310, %s27, 1
          %s312 = smul.addr %s311, 8
          %s313 = scalar_lea.vmem %s3, %s312
        $region66: #{output_module_ber.1} parent=15 // pred_fallthru
          _
        // Predicated region
        $region67: #{output_module_ber.1} parent=15 // pred_check
          %p314 = pneg %p155
        $region68: #{output_module_ber.1} parent=15 // pred_check_branch
          %316 = sbr.rel (%p314) target = $region70
        $region69: #{output_module_ber.1} parent=15 // pred_region
          %p317 = scmp.lt.s32.totalorder %s26, 2
          %s318 = scalar_select %p317, %s26, 2
          %s319 = scalar_lea.vmem %s4, %s318
        $region70: #{output_module_ber.1} parent=15 // pred_fallthru
          _
      $region16: #{output_module_ber.1} parent=5 // pred_fallthru
        _
      %p320 = scmp.le.s32.totalorder 1, %s19
      %p321 = scmp.lt.s32.totalorder %s19, 7
      %p322 = pnand %p320, %p321
      %p323 = pneg %p322
      // Predicated region
      $region71: #{output_module_ber.1} parent=5 // pred_check
        _
      $region72: #{output_module_ber.1} parent=5 // pred_check_branch
        %325 = sbr.rel (%p322) target = $region74
      $region73: #{output_module_ber.1} parent=5 // pred_region
        %s326 = ssub.s32 %s19, 1
        %s327 = sand.u32 %s70, 1
        %s328 = sand.u32 %s70, 1
        %s329 = smul.addr %s328, 40
        %s330 = scalar_lea.vmem [#allocation2], %s329
        // Predicated region
        $region75: #{output_module_ber.1} parent=73 // pred_check
          %p331 = pneg %p83
        $region76: #{output_module_ber.1} parent=73 // pred_check_branch
          %333 = sbr.rel (%p331) target = $region78
        $region77: #{output_module_ber.1} parent=73 // pred_region
          _
        $region78: #{output_module_ber.1} parent=73 // pred_fallthru
          _
        %p334 = scmp.lt.s32.totalorder %s29, 1
        %s335 = scalar_select %p334, %s29, 1
        %s336 = smul.addr %s335, 8
        %s337 = scalar_lea.vmem %s0, %s336
        %p338 = pneg %p57
        %p339 = pneg %p54
        %s340 = sand.u32 %s70, 1
        %s341 = sand.u32 %s70, 1
        %s342 = smul.addr %s341, 40
        %s343 = scalar_lea.vmem [#allocation2], %s342
        %p344 = pneg %p83
        %p345 = pneg %p80
        %p346 = scmp.lt.s32.totalorder %s28, 2
        %s347 = scalar_select %p346, %s28, 2
        %s348 = scalar_lea.vmem %s2, %s347
        %p349 = pneg %p109
        %p350 = pneg %p106
        %p351 = scmp.lt.s32.totalorder %s29, 1
        %s352 = scalar_select %p351, %s29, 1
        %s353 = smul.addr %s352, 8
        %s354 = scalar_lea.vmem %s3, %s353
        %p355 = pneg %p135
        %p356 = pneg %p132
        %p357 = scmp.lt.s32.totalorder %s28, 2
        %s358 = scalar_select %p357, %s28, 2
        %s359 = scalar_lea.vmem %s4, %s358
        %p360 = pneg %p161
        %p361 = pneg %p158
        %p362 = pneg %p189
        %p363 = pneg %p186
        %s364 = sand.u32 %s176, 1
        %s365 = scalar_lea.sflag [#allocation4], %s364
        %s366 = sand.u32 %s176, 1
        %s367 = smul.addr %s366, 8
        %s368 = scalar_lea.vmem [#allocation3], %s367
        %p369 = pneg %p217
        %p370 = pneg %p214
        %s371 = sand.u32 %s204, 1
        %s372 = scalar_lea.sflag [#allocation6], %s371
        %s373 = sand.u32 %s204, 1
        %s374 = smul.addr %s373, 8
        %s375 = scalar_lea.vmem [#allocation5], %s374
        %p376 = scmp.lt.s32.totalorder %s29, 1
        %s377 = scalar_select %p376, %s29, 1
        %s378 = smul.addr %s377, 8
        %s379 = scalar_lea.vmem %s0, %s378
        %p380 = scmp.lt.s32.totalorder %s28, 2
        %s381 = scalar_select %p380, %s28, 2
        %s382 = scalar_lea.vmem %s2, %s381
        %p383 = scmp.lt.s32.totalorder %s29, 1
        %s384 = scalar_select %p383, %s29, 1
        %s385 = smul.addr %s384, 8
        %s386 = scalar_lea.vmem %s3, %s385
        %p387 = scmp.lt.s32.totalorder %s28, 2
        %s388 = scalar_select %p387, %s28, 2
        %s389 = scalar_lea.vmem %s4, %s388
        %v390 = vld [vmem:[%s379] sm:$0xff]
        %v391 = vld [vmem:[%s330] sm:$0xff]
        %v392 = vld [vmem:[%s330 + $0x8] sm:$0xff]
        %v393 = vld [vmem:[%s330 + $0x10] sm:$0xff]
        %v394 = vld [vmem:[%s330 + $0x18] sm:$0xff]
        %v395 = vld [vmem:[%s330 + $0x20] sm:$0xf]
        %v396 = vld [vmem:[%s382] sm:$0x1]
        %v398 = vlaneseq
        %v399 = vshrl.u32 %v398, 7
        %v400 = vsub.s32 0, %v399
        %v401 = vrot.slane %v396, %v400
        %vm403 = vcmask 293888
        %v405 = vsel %vm403, %v390, 0
        %vm407 = vcmask 1043456
        %v409 = vsel %vm407, %v395, 0
        %411 = vmatprep.subr.mxu0 0.0
        %412 = vmatpush1.msra.mxu0 0.0
        %413 = vmatprep.subr.mxu0 0.0
        %414 = vmatpush1.msra.mxu0 0.0
        %415 = vmatprep.subr.mxu0 0.0
        %416 = vmatpush1.msra.mxu0 0.0
        %417 = vmatprep.subr.mxu0 0.0
        %418 = vmatpush1.msra.mxu0 0.0
        %419 = vmatprep.subr.mxu0 0.0
        %420 = vmatpush1.msra.mxu0 0.0
        %421 = vmatprep.subr.mxu0 0.0
        %422 = vmatpush1.msra.mxu0 0.0
        %423 = vmatprep.subr.mxu0 0.0
        %424 = vmatpush1.msra.mxu0 0.0
        %425 = vmatprep.subr.mxu0 0.0
        %426 = vmatpush1.msra.mxu0 0.0
        %427 = vmatprep.subr.mxu0 0.0
        %428 = vmatpush1.msra.mxu0 0.0
        %429 = vmatprep.subr.mxu0 0.0
        %430 = vmatpush1.msra.mxu0 0.0
        %431 = vmatprep.subr.mxu0 0.0
        %432 = vmatpush1.msra.mxu0 0.0
        %433 = vmatprep.subr.mxu0 0.0
        %434 = vmatpush1.msra.mxu0 %v409
        %435 = vmatprep.subr.mxu0 0.0
        %436 = vmatpush1.msra.mxu0 %v394
        %437 = vmatprep.subr.mxu0 0.0
        %438 = vmatpush1.msra.mxu0 %v393
        %439 = vmatprep.subr.mxu0 0.0
        %440 = vmatpush1.msra.mxu0 %v392
        %441 = vmatprep.subr.mxu0 0.0
        %442 = vmatpush1.msra.mxu0 %v391
        %443 = vmatprep.subr.mxu0 0.0
        %444 = vmatpush2.msra.mxu0 0.0
        %445 = vmatprep.subr.mxu0 0.0
        %446 = vmatpush2.msra.mxu0 0.0
        %447 = vmatprep.subr.mxu0 0.0
        %448 = vmatpush2.msra.mxu0 0.0
        %449 = vmatprep.subr.mxu0 0.0
        %450 = vmatpush2.msra.mxu0 0.0
        %451 = vmatprep.subr.mxu0 0.0
        %452 = vmatpush2.msra.mxu0 0.0
        %453 = vmatprep.subr.mxu0 0.0
        %454 = vmatpush2.msra.mxu0 0.0
        %455 = vmatprep.subr.mxu0 0.0
        %456 = vmatpush2.msra.mxu0 0.0
        %457 = vmatprep.subr.mxu0 0.0
        %458 = vmatpush2.msra.mxu0 0.0
        %459 = vmatprep.subr.mxu0 0.0
        %460 = vmatpush2.msra.mxu0 0.0
        %461 = vmatprep.subr.mxu0 0.0
        %462 = vmatpush2.msra.mxu0 0.0
        %463 = vmatprep.subr.mxu0 0.0
        %464 = vmatpush2.msra.mxu0 0.0
        %465 = vmatprep.subr.mxu0 0.0
        %466 = vmatpush2.msra.mxu0 0.0
        %467 = vmatprep.subr.mxu0 0.0
        %468 = vmatpush2.msra.mxu0 0.0
        %469 = vmatprep.subr.mxu0 0.0
        %470 = vmatpush2.msra.mxu0 0.0
        %471 = vmatprep.subr.mxu0 0.0
        %472 = vmatpush2.msra.mxu0 0.0
        %473 = vmatprep.subr.mxu0 0.0
        %474 = vmatpush2.msra.mxu0 0.0
        %475 = vmatprep.mubr.f32.mxu0 0.0
        %476 = vmatmul.mubr.f32.gmra.mxu0 %v405
        %v477 = vpop.f32.mrf.mxu0
        %v478 = vadd.f32 %v401, %v477
        %v479 = vpop.f32.mrf.mxu0
        %480 = vdwg.mxu0
        %v481 = vxor.u32 %v478, 2147483648
        %v482 = vmul.f32 %v481, 1.442695
        %v483 = vpow.pop %v482
        %v484 = vadd.f32 %v483, 1.0
        %v485 = vrcp.pop %v484
        %v486 = vmul.f32 1.0, %v485
        %487 = vst [vmem:[%s375] sm:$0xff] %v486
        %v488 = vld [vmem:[%s386] sm:$0xff]
        %490 = vset.pattern.permute.xlu0 0
        %491 = vperm.xlu0 %490, %v488
        %v492 = vpop.permute.xlu0 %491
        %v494 = vmul.f32 %v486, %v492
        %v495 = vld [vmem:[%s389] sm:$0x1]
        %v497 = vlaneseq
        %v498 = vshrl.u32 %v497, 7
        %v499 = vsub.s32 0, %v498
        %v500 = vrot.slane %v495, %v499
        %v502 = vmul.f32 %v494, %v500
        %503 = vst [vmem:[%s368] sm:$0xff] %v502
        %s504 = sand.u32 %s176, 1
        %s505 = scalar_lea.sflag [#allocation4], %s504
        %s506 = sand.u32 %s176, 1
        %s507 = smul.addr %s506, 8
        %s508 = scalar_lea.vmem [#allocation3], %s507
        %s509 = sand.u32 %s204, 1
        %s510 = scalar_lea.sflag [#allocation6], %s509
        %s511 = sand.u32 %s204, 1
        %s512 = smul.addr %s511, 8
        %s513 = scalar_lea.vmem [#allocation5], %s512
        // Predicated region
        $region79: #{output_module_ber.1} parent=73 // pred_check
          %p514 = pneg %p186
        $region80: #{output_module_ber.1} parent=73 // pred_check_branch
          %516 = sbr.rel (%p514) target = $region82
        $region81: #{output_module_ber.1} parent=73 // pred_region
          %s518 = ssub.s32 128, 128
          %519 = vsyncadd %s505, %s518
          %s520 = smul.addr %s29, 3
          %s521 = sadd.s32 %s28, %s520
          %s522 = smul.addr %s521, 128
          %s523 = scalar_lea.hbm %s5, %s522
          %s525 = sshll.u32 %s508, 4
          %s526 = int_to_ptr.vmem [resolvable:$true] %s525
          %528 = dma.vmem_to_hbm [thread:$0]  %s526, 128, %s523, %s505
        $region82: #{output_module_ber.1} parent=73 // pred_fallthru
          _
        // Predicated region
        $region83: #{output_module_ber.1} parent=73 // pred_check
          %p529 = pneg %p214
        $region84: #{output_module_ber.1} parent=73 // pred_check_branch
          %531 = sbr.rel (%p529) target = $region86
        $region85: #{output_module_ber.1} parent=73 // pred_region
          %s533 = ssub.s32 128, 128
          %534 = vsyncadd %s510, %s533
          %s535 = smul.addr %s29, 3
          %s536 = sadd.s32 %s28, %s535
          %s537 = smul.addr %s536, 128
          %s538 = scalar_lea.hbm %s6, %s537
          %s540 = sshll.u32 %s513, 4
          %s541 = int_to_ptr.vmem [resolvable:$true] %s540
          %543 = dma.vmem_to_hbm [thread:$0]  %s541, 128, %s538, %s510
        $region86: #{output_module_ber.1} parent=73 // pred_fallthru
          _
      $region74: #{output_module_ber.1} parent=5 // pred_fallthru
        _
      %p544 = scmp.le.s32.totalorder 2, %s19
      // Predicated region
      $region87: #{output_module_ber.1} parent=5 // pred_check
        %p545 = pneg %p544
      $region88: #{output_module_ber.1} parent=5 // pred_check_branch
        %547 = sbr.rel (%p545) target = $region90
      $region89: #{output_module_ber.1} parent=5 // pred_region
        %s548 = ssub.s32 %s19, 2
        // Predicated region
        $region91: #{output_module_ber.1} parent=89 // pred_check
          %p549 = pneg %p192
        $region92: #{output_module_ber.1} parent=89 // pred_check_branch
          %551 = sbr.rel (%p549) target = $region94
        $region93: #{output_module_ber.1} parent=89 // pred_region
          %s552 = sand.u32 %s177, 1
          %s553 = scalar_lea.sflag [#allocation4], %s552
          %s554 = sand.u32 %s177, 1
          %s555 = smul.addr %s554, 8
          %s556 = scalar_lea.vmem [#allocation3], %s555
          %557 = dma.done %s553, 128
        $region94: #{output_module_ber.1} parent=89 // pred_fallthru
          _
        // Predicated region
        $region95: #{output_module_ber.1} parent=89 // pred_check
          %p558 = pneg %p220
        $region96: #{output_module_ber.1} parent=89 // pred_check_branch
          %560 = sbr.rel (%p558) target = $region98
        $region97: #{output_module_ber.1} parent=89 // pred_region
          %s561 = sand.u32 %s205, 1
          %s562 = scalar_lea.sflag [#allocation6], %s561
          %s563 = sand.u32 %s205, 1
          %s564 = smul.addr %s563, 8
          %s565 = scalar_lea.vmem [#allocation5], %s564
          %566 = dma.done %s562, 128
        $region98: #{output_module_ber.1} parent=89 // pred_fallthru
          _
      $region90: #{output_module_ber.1} parent=5 // pred_fallthru
        _
    $region6: #{output_module_ber.1} parent=1 // loop_footer
      %s23 = sadd.s32 1, %s19
    $region7: #{output_module_ber.1} parent=1 // loop_footer_branch
      %18 = sbr.rel target = $region3
    $region8: #{output_module_ber.1} parent=1 // loop_exit
      _
    %567 = vsyncpa [#allocation4], 1
    %s568 = scalar_lea.sflag [#allocation4], 1
    %569 = vsyncpa %s568, 1
    %570 = vsyncpa [#allocation6], 1
    %s571 = scalar_lea.sflag [#allocation6], 1
    %572 = vsyncpa %s571, 1

</llo_original>
